<compile_context>
chip_gen: v7x
topology: tpu7x:2x2x1
jax: 0.10.0
libtpu: 0.0.40
codegen_flags: <defaults>
</compile_context>

<pallas_src>
import math

import numpy as np
import jax
import jax.numpy as jnp
from jax.experimental import pallas as pl
from jax.experimental.pallas import tpu as pltpu

_EPS = 1e-6
_LANE = 128

# --- color-space matrices (same construction as RGBtoLab / LabtoRGB buffers) ---
_SCALE = np.diag([1.0 / math.sqrt(3.0), 1.0 / math.sqrt(6.0), 1.0 / math.sqrt(2.0)])
RGB_TO_LMS = np.array(
    [[0.3811, 0.5783, 0.0402],
     [0.1967, 0.7244, 0.0782],
     [0.0241, 0.1288, 0.8444]], dtype=np.float64)
LOGLMS_TO_LAB = _SCALE @ np.array(
    [[1.0, 1.0, 1.0],
     [1.0, 1.0, -2.0],
     [1.0, -1.0, 0.0]], dtype=np.float64)
LAB_TO_LOGLMS = np.array(
    [[1.0, 1.0, 1.0],
     [1.0, 1.0, -1.0],
     [1.0, -2.0, 0.0]], dtype=np.float64) @ _SCALE
LMS_TO_RGB = np.array(
    [[4.4679, -3.5873, 0.1193],
     [-1.2186, 2.3809, -0.1624],
     [0.0497, -0.2439, 1.2045]], dtype=np.float64)


def _relight_kernel(m_ref, mo_ref, x_ref, o_ref):
    """Kernel body.

    m_ref:  (B, 9) f32 SMEM  -- folded per-batch middle 3x3, row-major over [c, e].
    mo_ref: (B, 9) f32 SMEM  -- exp(bias)-folded output 3x3, row-major over [e, f].
    x_ref:  (3, TS, 128) f32 VMEM (batch dim squeezed) -- dense channel slabs.
    o_ref:  (3, TS, 128) f32 VMEM.
    """
    b = pl.program_id(0)

    # Dense (TS, 128) per-channel loads; clamp like RGBtoLab.
    r = jnp.clip(x_ref[0], _EPS, 1.0 - _EPS)
    g = jnp.clip(x_ref[1], _EPS, 1.0 - _EPS)
    bch = jnp.clip(x_ref[2], _EPS, 1.0 - _EPS)

    # RGB -> LMS: constant 3x3 as explicit FMA-style sums (no `0 + term`), VPU only.
    lms0 = r * float(RGB_TO_LMS[0, 0]) + g * float(RGB_TO_LMS[1, 0]) + bch * float(RGB_TO_LMS[2, 0])
    lms1 = r * float(RGB_TO_LMS[0, 1]) + g * float(RGB_TO_LMS[1, 1]) + bch * float(RGB_TO_LMS[2, 1])
    lms2 = r * float(RGB_TO_LMS[0, 2]) + g * float(RGB_TO_LMS[1, 2]) + bch * float(RGB_TO_LMS[2, 2])

    l0 = jnp.log(lms0)                                           # EUP
    l1 = jnp.log(lms1)
    l2 = jnp.log(lms2)

    # Folded (LOGLMS_TO_LAB @ diag(scale) @ LAB_TO_LOGLMS); per-batch bias is folded into
    # the exp via M_out, so no per-pixel bias add here. Scalar-broadcast VPU madds.
    e0 = jnp.exp(l0 * m_ref[b, 0] + l1 * m_ref[b, 3] + l2 * m_ref[b, 6])   # EUP
    e1 = jnp.exp(l0 * m_ref[b, 1] + l1 * m_ref[b, 4] + l2 * m_ref[b, 7])
    e2 = jnp.exp(l0 * m_ref[b, 2] + l1 * m_ref[b, 5] + l2 * m_ref[b, 8])

    # LMS -> RGB with exp(bias) folded into the per-batch output matrix; dense stores.
    o_ref[0] = jnp.clip(e0 * mo_ref[b, 0] + e1 * mo_ref[b, 3] + e2 * mo_ref[b, 6], 0.0, 1.0)
    o_ref[1] = jnp.clip(e0 * mo_ref[b, 1] + e1 * mo_ref[b, 4] + e2 * mo_ref[b, 7], 0.0, 1.0)
    o_ref[2] = jnp.clip(e0 * mo_ref[b, 2] + e1 * mo_ref[b, 5] + e2 * mo_ref[b, 8], 0.0, 1.0)


def relight_transform_color_transfer_lab(inputs, relight_coeffs, *, tile_rows=1024):
    """inputs: (B, 3, H, W) f32 RGB in [0,1]; relight_coeffs: (B or 1, 3, 2) f32."""
    B, C, H, W = inputs.shape
    assert C == 3
    assert tile_rows % 8 == 0
    HW = H * W

    # ---- lane-dense layout: view spatial as (rows, 128); pad only when ragged ----
    rows = -(-HW // _LANE)
    hw_padded = rows * _LANE

    x = inputs.reshape(B, 3, HW).astype(jnp.float32)
    if hw_padded != HW:
        # Pad with 0.5 (mid-range, log/exp-safe) so padded lanes never hit -inf/NaN.
        x = jnp.pad(x, ((0, 0), (0, 0), (0, hw_padded - HW)), constant_values=0.5)
    x = x.reshape(B, 3, rows, _LANE)   # free (contiguous) reshape when HW % 128 == 0

    # ---- tile size: multiple of 8 (or full extent); partial edge blocks, no row padding ----
    if rows > tile_rows:
        ts = tile_rows
    elif B == 1 and rows >= 16:
        # Split rows so a second "parallel" grid step exists (v7x has 2 TensorCores).
        ts = ((-(-rows // 2)) + 7) // 8 * 8
    else:
        ts = rows                       # full extent -> no (8,) constraint
    num_row_tiles = pl.cdiv(rows, ts)

    # ---- fold the middle stage + exp(bias) per batch (plain JAX, negligible cost) ----
    coeffs = relight_coeffs.reshape(-1, 3, 2).astype(jnp.float32)
    if coeffs.shape[0] == 1 and B > 1:
        coeffs = jnp.broadcast_to(coeffs, (B, 3, 2))
    scale = coeffs[..., 0]                                   # (B, 3)
    bias = coeffs[..., 1]                                    # (B, 3)
    a_mat = jnp.asarray(LOGLMS_TO_LAB, jnp.float32)          # [c, d]
    b_mat = jnp.asarray(LAB_TO_LOGLMS, jnp.float32)          # [d, e]
    out_mat = jnp.asarray(LMS_TO_RGB, jnp.float32)           # [e, f]
    m_comb = jnp.einsum('cd,bd,de->bce', a_mat, scale, b_mat).reshape(B, 9)
    bias_comb = jnp.einsum('bd,de->be', bias, b_mat)         # (B, 3)
    m_out = (jnp.exp(bias_comb)[:, :, None] * out_mat[None, :, :]).reshape(B, 9)

    grid = (B, num_row_tiles)

    n_elem = B * 3 * rows * _LANE
    cost = pl.CostEstimate(
        flops=19 * n_elem,              # ~19 VALU ops per element
        transcendentals=2 * n_elem,     # 1 log + 1 exp per element
        bytes_accessed=2 * 4 * n_elem,  # f32 in + out
    )

    out = pl.pallas_call(
        _relight_kernel,
        out_shape=jax.ShapeDtypeStruct((B, 3, rows, _LANE), jnp.float32),
        grid_spec=pltpu.PrefetchScalarGridSpec(
            num_scalar_prefetch=2,
            grid=grid,
            in_specs=[
                pl.BlockSpec((None, 3, ts, _LANE), lambda b, n, *_: (b, 0, n, 0)),
            ],
            out_specs=pl.BlockSpec((None, 3, ts, _LANE), lambda b, n, *_: (b, 0, n, 0)),
        ),
        compiler_params=pltpu.CompilerParams(
            dimension_semantics=("parallel", "parallel")),
        cost_estimate=cost,
    )(m_comb, m_out, x)

    out = out.reshape(B, 3, hw_padded)
    if hw_padded != HW:
        out = out[:, :, :HW]
    return out.reshape(B, 3, H, W)

    # TODO(synk): optional bf16 HBM I/O (keep f32 math inside) would halve HBM bytes on
    # mem-bound chips, but is left off to preserve the module's float32 semantics.


def _reference(inputs, relight_coeffs):
    """Plain-JAX reference mirroring the PyTorch _color_transfer (staged) path."""
    B = inputs.shape[0]
    xc = jnp.clip(inputs, _EPS, 1.0 - _EPS)
    m_rgb2lms = jnp.asarray(RGB_TO_LMS, jnp.float32)
    m_loglms2lab = jnp.asarray(LOGLMS_TO_LAB, jnp.float32)
    m_lab2loglms = jnp.asarray(LAB_TO_LOGLMS, jnp.float32)
    m_lms2rgb = jnp.asarray(LMS_TO_RGB, jnp.float32)
    lms = jnp.einsum('bchw,cd->bdhw', xc, m_rgb2lms)
    lab = jnp.einsum('bchw,cd->bdhw', jnp.log(lms), m_loglms2lab)
    ct = relight_coeffs.reshape(-1, 3, 2, 1, 1)
    if ct.shape[0] == 1 and B > 1:
        ct = jnp.broadcast_to(ct, (B, 3, 2, 1, 1))
    lab_out = lab * ct[:, :, 0] + ct[:, :, 1]
    loglms = jnp.einsum('bchw,cd->bdhw', lab_out, m_lab2loglms)
    rgb = jnp.einsum('bchw,cd->bdhw', jnp.exp(loglms), m_lms2rgb)
    return jnp.clip(rgb, 0.0, 1.0)


def _run_case(key, B, H, W, tile_rows):
    k1, k2, k3 = jax.random.split(key, 3)
    inputs = jax.random.uniform(k1, (B, 3, H, W), dtype=jnp.float32)
    scale = jax.random.uniform(k2, (B, 3, 1), dtype=jnp.float32, minval=0.8, maxval=1.2)
    bias = jax.random.uniform(k3, (B, 3, 1), dtype=jnp.float32, minval=-0.05, maxval=0.05)
    relight_coeffs = jnp.concatenate([scale, bias], axis=-1)

    fn = jax.jit(relight_transform_color_transfer_lab, static_argnames=("tile_rows",))
    out = jax.block_until_ready(fn(inputs, relight_coeffs, tile_rows=tile_rows))
    ref = jax.block_until_ready(_reference(inputs, relight_coeffs))
    # Folded middle stage / exp(bias) fold reassociate the math; tiny f32 rounding diffs.
    np.testing.assert_allclose(np.asarray(out), np.asarray(ref), atol=2e-4, rtol=2e-4)


if __name__ == "__main__":
    key = jax.random.PRNGKey(0)
    keys = jax.random.split(key, 3)

    # 1) Small, zero-copy fast path (HW % 128 == 0), batch axis gives 2 parallel steps.
    _run_case(keys[0], B=2, H=16, W=16, tile_rows=1024)
    # 2) Ragged HW (pad to 128 lanes) + multi-tile grid with a partial edge row-block.
    _run_case(keys[1], B=1, H=40, W=33, tile_rows=8)
    # 3) B == 1, zero-copy path: rows are split so two parallel grid steps exist.
    _run_case(keys[2], B=1, H=64, W=64, tile_rows=1024)

    print("KERNEL_OK")
</pallas_src>

<mosaic_0001>
module attributes {stable_mosaic.version = 11 : i64} {
  func.func @_relight_kernel(%arg0: i32, %arg1: i32, %arg2: memref<2x9xf32, #tpu.memory_space<smem>>, %arg3: memref<2x9xf32, #tpu.memory_space<smem>>, %arg4: memref<1x3x2x128xf32, #tpu.memory_space<vmem>>, %arg5: memref<1x3x2x128xf32, #tpu.memory_space<vmem>>) attributes {dimension_semantics = [#tpu.dimension_semantics<parallel>, #tpu.dimension_semantics<parallel>], iteration_bounds = array<i64: 2, 1>, scalar_prefetch = 2 : i64, scratch_operands = 0 : i64, tpu.core_type = #tpu.core_type<tc>, window_params = [{transform_indices = @transform_0, window_bounds = array<i64: 1, 3, 2, 128>}, {transform_indices = @transform_1, window_bounds = array<i64: 1, 3, 2, 128>}]} {
    %c0 = arith.constant 0 : index
    %c0_0 = arith.constant 0 : index
    %c0_1 = arith.constant 0 : index
    %c0_2 = arith.constant 0 : index
    %0 = vector.load %arg4[%c0, %c0_0, %c0_1, %c0_2] : memref<1x3x2x128xf32, #tpu.memory_space<vmem>>, vector<1x1x2x128xf32>
    %1 = vector.shape_cast %0 : vector<1x1x2x128xf32> to vector<2x128xf32>
    %cst = arith.constant 9.99999997E-7 : f32
    %cst_3 = arith.constant 0.999998986 : f32
    %2 = vector.broadcast %cst : f32 to vector<2x128xf32>
    %3 = arith.maximumf %2, %1 : vector<2x128xf32>
    %4 = vector.broadcast %cst_3 : f32 to vector<2x128xf32>
    %5 = arith.minimumf %4, %3 : vector<2x128xf32>
    %c0_4 = arith.constant 0 : index
    %c1 = arith.constant 1 : index
    %c0_5 = arith.constant 0 : index
    %c0_6 = arith.constant 0 : index
    %6 = vector.load %arg4[%c0_4, %c1, %c0_5, %c0_6] : memref<1x3x2x128xf32, #tpu.memory_space<vmem>>, vector<1x1x2x128xf32>
    %7 = vector.shape_cast %6 : vector<1x1x2x128xf32> to vector<2x128xf32>
    %cst_7 = arith.constant 9.99999997E-7 : f32
    %cst_8 = arith.constant 0.999998986 : f32
    %8 = vector.broadcast %cst_7 : f32 to vector<2x128xf32>
    %9 = arith.maximumf %8, %7 : vector<2x128xf32>
    %10 = vector.broadcast %cst_8 : f32 to vector<2x128xf32>
    %11 = arith.minimumf %10, %9 : vector<2x128xf32>
    %c0_9 = arith.constant 0 : index
    %c2 = arith.constant 2 : index
    %c0_10 = arith.constant 0 : index
    %c0_11 = arith.constant 0 : index
    %12 = vector.load %arg4[%c0_9, %c2, %c0_10, %c0_11] : memref<1x3x2x128xf32, #tpu.memory_space<vmem>>, vector<1x1x2x128xf32>
    %13 = vector.shape_cast %12 : vector<1x1x2x128xf32> to vector<2x128xf32>
    %cst_12 = arith.constant 9.99999997E-7 : f32
    %cst_13 = arith.constant 0.999998986 : f32
    %14 = vector.broadcast %cst_12 : f32 to vector<2x128xf32>
    %15 = arith.maximumf %14, %13 : vector<2x128xf32>
    %16 = vector.broadcast %cst_13 : f32 to vector<2x128xf32>
    %17 = arith.minimumf %16, %15 : vector<2x128xf32>
    %cst_14 = arith.constant 3.811000e-01 : f32
    %18 = vector.broadcast %cst_14 : f32 to vector<2x128xf32>
    %19 = arith.mulf %5, %18 : vector<2x128xf32>
    %cst_15 = arith.constant 1.967000e-01 : f32
    %20 = vector.broadcast %cst_15 : f32 to vector<2x128xf32>
    %21 = arith.mulf %11, %20 : vector<2x128xf32>
    %22 = arith.addf %19, %21 : vector<2x128xf32>
    %cst_16 = arith.constant 2.410000e-02 : f32
    %23 = vector.broadcast %cst_16 : f32 to vector<2x128xf32>
    %24 = arith.mulf %17, %23 : vector<2x128xf32>
    %25 = arith.addf %22, %24 : vector<2x128xf32>
    %cst_17 = arith.constant 5.783000e-01 : f32
    %26 = vector.broadcast %cst_17 : f32 to vector<2x128xf32>
    %27 = arith.mulf %5, %26 : vector<2x128xf32>
    %cst_18 = arith.constant 0.724399983 : f32
    %28 = vector.broadcast %cst_18 : f32 to vector<2x128xf32>
    %29 = arith.mulf %11, %28 : vector<2x128xf32>
    %30 = arith.addf %27, %29 : vector<2x128xf32>
    %cst_19 = arith.constant 1.288000e-01 : f32
    %31 = vector.broadcast %cst_19 : f32 to vector<2x128xf32>
    %32 = arith.mulf %17, %31 : vector<2x128xf32>
    %33 = arith.addf %30, %32 : vector<2x128xf32>
    %cst_20 = arith.constant 4.020000e-02 : f32
    %34 = vector.broadcast %cst_20 : f32 to vector<2x128xf32>
    %35 = arith.mulf %5, %34 : vector<2x128xf32>
    %cst_21 = arith.constant 7.820000e-02 : f32
    %36 = vector.broadcast %cst_21 : f32 to vector<2x128xf32>
    %37 = arith.mulf %11, %36 : vector<2x128xf32>
    %38 = arith.addf %35, %37 : vector<2x128xf32>
    %cst_22 = arith.constant 0.844399988 : f32
    %39 = vector.broadcast %cst_22 : f32 to vector<2x128xf32>
    %40 = arith.mulf %17, %39 : vector<2x128xf32>
    %41 = arith.addf %38, %40 : vector<2x128xf32>
    %42 = math.log %25 : vector<2x128xf32>
    %43 = math.log %33 : vector<2x128xf32>
    %44 = math.log %41 : vector<2x128xf32>
    %45 = arith.index_cast %arg0 : i32 to index
    %c0_23 = arith.constant 0 : index
    %46 = memref.load %arg2[%45, %c0_23] : memref<2x9xf32, #tpu.memory_space<smem>>
    %47 = vector.broadcast %46 : f32 to vector<2x128xf32>
    %48 = arith.mulf %42, %47 : vector<2x128xf32>
    %49 = arith.index_cast %arg0 : i32 to index
    %c3 = arith.constant 3 : index
    %50 = memref.load %arg2[%49, %c3] : memref<2x9xf32, #tpu.memory_space<smem>>
    %51 = vector.broadcast %50 : f32 to vector<2x128xf32>
    %52 = arith.mulf %43, %51 : vector<2x128xf32>
    %53 = arith.addf %48, %52 : vector<2x128xf32>
    %54 = arith.index_cast %arg0 : i32 to index
    %c6 = arith.constant 6 : index
    %55 = memref.load %arg2[%54, %c6] : memref<2x9xf32, #tpu.memory_space<smem>>
    %56 = vector.broadcast %55 : f32 to vector<2x128xf32>
    %57 = arith.mulf %44, %56 : vector<2x128xf32>
    %58 = arith.addf %53, %57 : vector<2x128xf32>
    %59 = math.exp %58 : vector<2x128xf32>
    %60 = arith.index_cast %arg0 : i32 to index
    %c1_24 = arith.constant 1 : index
    %61 = memref.load %arg2[%60, %c1_24] : memref<2x9xf32, #tpu.memory_space<smem>>
    %62 = vector.broadcast %61 : f32 to vector<2x128xf32>
    %63 = arith.mulf %42, %62 : vector<2x128xf32>
    %64 = arith.index_cast %arg0 : i32 to index
    %c4 = arith.constant 4 : index
    %65 = memref.load %arg2[%64, %c4] : memref<2x9xf32, #tpu.memory_space<smem>>
    %66 = vector.broadcast %65 : f32 to vector<2x128xf32>
    %67 = arith.mulf %43, %66 : vector<2x128xf32>
    %68 = arith.addf %63, %67 : vector<2x128xf32>
    %69 = arith.index_cast %arg0 : i32 to index
    %c7 = arith.constant 7 : index
    %70 = memref.load %arg2[%69, %c7] : memref<2x9xf32, #tpu.memory_space<smem>>
    %71 = vector.broadcast %70 : f32 to vector<2x128xf32>
    %72 = arith.mulf %44, %71 : vector<2x128xf32>
    %73 = arith.addf %68, %72 : vector<2x128xf32>
    %74 = math.exp %73 : vector<2x128xf32>
    %75 = arith.index_cast %arg0 : i32 to index
    %c2_25 = arith.constant 2 : index
    %76 = memref.load %arg2[%75, %c2_25] : memref<2x9xf32, #tpu.memory_space<smem>>
    %77 = vector.broadcast %76 : f32 to vector<2x128xf32>
    %78 = arith.mulf %42, %77 : vector<2x128xf32>
    %79 = arith.index_cast %arg0 : i32 to index
    %c5 = arith.constant 5 : index
    %80 = memref.load %arg2[%79, %c5] : memref<2x9xf32, #tpu.memory_space<smem>>
    %81 = vector.broadcast %80 : f32 to vector<2x128xf32>
    %82 = arith.mulf %43, %81 : vector<2x128xf32>
    %83 = arith.addf %78, %82 : vector<2x128xf32>
    %84 = arith.index_cast %arg0 : i32 to index
    %c8 = arith.constant 8 : index
    %85 = memref.load %arg2[%84, %c8] : memref<2x9xf32, #tpu.memory_space<smem>>
    %86 = vector.broadcast %85 : f32 to vector<2x128xf32>
    %87 = arith.mulf %44, %86 : vector<2x128xf32>
    %88 = arith.addf %83, %87 : vector<2x128xf32>
    %89 = math.exp %88 : vector<2x128xf32>
    %90 = arith.index_cast %arg0 : i32 to index
    %c0_26 = arith.constant 0 : index
    %91 = memref.load %arg3[%90, %c0_26] : memref<2x9xf32, #tpu.memory_space<smem>>
    %92 = vector.broadcast %91 : f32 to vector<2x128xf32>
    %93 = arith.mulf %59, %92 : vector<2x128xf32>
    %94 = arith.index_cast %arg0 : i32 to index
    %c3_27 = arith.constant 3 : index
    %95 = memref.load %arg3[%94, %c3_27] : memref<2x9xf32, #tpu.memory_space<smem>>
    %96 = vector.broadcast %95 : f32 to vector<2x128xf32>
    %97 = arith.mulf %74, %96 : vector<2x128xf32>
    %98 = arith.addf %93, %97 : vector<2x128xf32>
    %99 = arith.index_cast %arg0 : i32 to index
    %c6_28 = arith.constant 6 : index
    %100 = memref.load %arg3[%99, %c6_28] : memref<2x9xf32, #tpu.memory_space<smem>>
    %101 = vector.broadcast %100 : f32 to vector<2x128xf32>
    %102 = arith.mulf %89, %101 : vector<2x128xf32>
    %103 = arith.addf %98, %102 : vector<2x128xf32>
    %cst_29 = arith.constant 0.000000e+00 : f32
    %cst_30 = arith.constant 1.000000e+00 : f32
    %104 = vector.broadcast %cst_29 : f32 to vector<2x128xf32>
    %105 = arith.maximumf %104, %103 : vector<2x128xf32>
    %106 = vector.broadcast %cst_30 : f32 to vector<2x128xf32>
    %107 = arith.minimumf %106, %105 : vector<2x128xf32>
    %c0_31 = arith.constant 0 : index
    %c0_32 = arith.constant 0 : index
    %c0_33 = arith.constant 0 : index
    %c0_34 = arith.constant 0 : index
    %108 = vector.load %arg5[%c0_31, %c0_32, %c0_33, %c0_34] : memref<1x3x2x128xf32, #tpu.memory_space<vmem>>, vector<1x1x2x128xf32>
    %109 = vector.shape_cast %108 : vector<1x1x2x128xf32> to vector<2x128xf32>
    %110 = vector.shape_cast %107 : vector<2x128xf32> to vector<1x1x2x128xf32>
    tpu.vector_store %arg5[%c0_31, %c0_32, %c0_33, %c0_34], %110 {strides = array<i32>} : memref<1x3x2x128xf32, #tpu.memory_space<vmem>>, vector<1x1x2x128xf32>,
    %111 = arith.index_cast %arg0 : i32 to index
    %c1_35 = arith.constant 1 : index
    %112 = memref.load %arg3[%111, %c1_35] : memref<2x9xf32, #tpu.memory_space<smem>>
    %113 = vector.broadcast %112 : f32 to vector<2x128xf32>
    %114 = arith.mulf %59, %113 : vector<2x128xf32>
    %115 = arith.index_cast %arg0 : i32 to index
    %c4_36 = arith.constant 4 : index
    %116 = memref.load %arg3[%115, %c4_36] : memref<2x9xf32, #tpu.memory_space<smem>>
    %117 = vector.broadcast %116 : f32 to vector<2x128xf32>
    %118 = arith.mulf %74, %117 : vector<2x128xf32>
    %119 = arith.addf %114, %118 : vector<2x128xf32>
    %120 = arith.index_cast %arg0 : i32 to index
    %c7_37 = arith.constant 7 : index
    %121 = memref.load %arg3[%120, %c7_37] : memref<2x9xf32, #tpu.memory_space<smem>>
    %122 = vector.broadcast %121 : f32 to vector<2x128xf32>
    %123 = arith.mulf %89, %122 : vector<2x128xf32>
    %124 = arith.addf %119, %123 : vector<2x128xf32>
    %cst_38 = arith.constant 0.000000e+00 : f32
    %cst_39 = arith.constant 1.000000e+00 : f32
    %125 = vector.broadcast %cst_38 : f32 to vector<2x128xf32>
    %126 = arith.maximumf %125, %124 : vector<2x128xf32>
    %127 = vector.broadcast %cst_39 : f32 to vector<2x128xf32>
    %128 = arith.minimumf %127, %126 : vector<2x128xf32>
    %c0_40 = arith.constant 0 : index
    %c1_41 = arith.constant 1 : index
    %c0_42 = arith.constant 0 : index
    %c0_43 = arith.constant 0 : index
    %129 = vector.load %arg5[%c0_40, %c1_41, %c0_42, %c0_43] : memref<1x3x2x128xf32, #tpu.memory_space<vmem>>, vector<1x1x2x128xf32>
    %130 = vector.shape_cast %129 : vector<1x1x2x128xf32> to vector<2x128xf32>
    %131 = vector.shape_cast %128 : vector<2x128xf32> to vector<1x1x2x128xf32>
    tpu.vector_store %arg5[%c0_40, %c1_41, %c0_42, %c0_43], %131 {strides = array<i32>} : memref<1x3x2x128xf32, #tpu.memory_space<vmem>>, vector<1x1x2x128xf32>,
    %132 = arith.index_cast %arg0 : i32 to index
    %c2_44 = arith.constant 2 : index
    %133 = memref.load %arg3[%132, %c2_44] : memref<2x9xf32, #tpu.memory_space<smem>>
    %134 = vector.broadcast %133 : f32 to vector<2x128xf32>
    %135 = arith.mulf %59, %134 : vector<2x128xf32>
    %136 = arith.index_cast %arg0 : i32 to index
    %c5_45 = arith.constant 5 : index
    %137 = memref.load %arg3[%136, %c5_45] : memref<2x9xf32, #tpu.memory_space<smem>>
    %138 = vector.broadcast %137 : f32 to vector<2x128xf32>
    %139 = arith.mulf %74, %138 : vector<2x128xf32>
    %140 = arith.addf %135, %139 : vector<2x128xf32>
    %141 = arith.index_cast %arg0 : i32 to index
    %c8_46 = arith.constant 8 : index
    %142 = memref.load %arg3[%141, %c8_46] : memref<2x9xf32, #tpu.memory_space<smem>>
    %143 = vector.broadcast %142 : f32 to vector<2x128xf32>
    %144 = arith.mulf %89, %143 : vector<2x128xf32>
    %145 = arith.addf %140, %144 : vector<2x128xf32>
    %cst_47 = arith.constant 0.000000e+00 : f32
    %cst_48 = arith.constant 1.000000e+00 : f32
    %146 = vector.broadcast %cst_47 : f32 to vector<2x128xf32>
    %147 = arith.maximumf %146, %145 : vector<2x128xf32>
    %148 = vector.broadcast %cst_48 : f32 to vector<2x128xf32>
    %149 = arith.minimumf %148, %147 : vector<2x128xf32>
    %c0_49 = arith.constant 0 : index
    %c2_50 = arith.constant 2 : index
    %c0_51 = arith.constant 0 : index
    %c0_52 = arith.constant 0 : index
    %150 = vector.load %arg5[%c0_49, %c2_50, %c0_51, %c0_52] : memref<1x3x2x128xf32, #tpu.memory_space<vmem>>, vector<1x1x2x128xf32>
    %151 = vector.shape_cast %150 : vector<1x1x2x128xf32> to vector<2x128xf32>
    %152 = vector.shape_cast %149 : vector<2x128xf32> to vector<1x1x2x128xf32>
    tpu.vector_store %arg5[%c0_49, %c2_50, %c0_51, %c0_52], %152 {strides = array<i32>} : memref<1x3x2x128xf32, #tpu.memory_space<vmem>>, vector<1x1x2x128xf32>,
    return
  }
  func.func @transform_0(%arg0: i32, %arg1: i32, %arg2: memref<2x9xf32, #tpu.memory_space<smem>>, %arg3: memref<2x9xf32, #tpu.memory_space<smem>>) -> (i32, i32, i32, i32) {
    %c0_i32 = arith.constant 0 : i32
    %c0_i32_0 = arith.constant 0 : i32
    %c0_i32_1 = arith.constant 0 : i32
    return %arg0, %c0_i32, %arg1, %c0_i32_0 : i32, i32, i32, i32
  }
  func.func @transform_1(%arg0: i32, %arg1: i32, %arg2: memref<2x9xf32, #tpu.memory_space<smem>>, %arg3: memref<2x9xf32, #tpu.memory_space<smem>>) -> (i32, i32, i32, i32) {
    %c0_i32 = arith.constant 0 : i32
    %c0_i32_0 = arith.constant 0 : i32
    %c0_i32_1 = arith.constant 0 : i32
    return %arg0, %c0_i32, %arg1, %c0_i32_0 : i32, i32, i32, i32
  }
}

</mosaic_0001>

<llo_original>
// kernel: relight_transform_color_transfer_lab.1
$region0: #{relight_transform_color_transfer_lab.1}
  #allocation0 [shape = 'u32[]', space=smem, size = 0x4, offset = 0x4, fixed_abs, tag = 'smem constant byte address 0x4 - core index']
  #allocation1 [shape = 'u32[144,128]{1,0:T(1,128)}', space=vmem, size = 0x12000, scoped, tag = 'internal scratch']
  #allocation2 [shape = 's32[1]{0}', space=sflag, size = 0x4, scoped, tag = 'scoped memory for relight_transform_color_transfer_lab.1']
  #allocation3 [shape = 'u8[1024]{0}', space=smem, size = 0x400, scoped, tag = 'prefetched SMEM operand 0']
  #allocation4 [shape = 'u8[1024]{0}', space=smem, size = 0x400, scoped, tag = 'prefetched SMEM operand 1']
  %s0 = inlined_call_operand.vmem [shape: f32[2,9], index: 0, kind: input, shape index: {}]
  %s1 = inlined_call_operand.vmem [shape: f32[2,9], index: 1, kind: input, shape index: {}]
  %s2 = inlined_call_operand.vmem [shape: f32[2,3,2,128], index: 2, kind: input, shape index: {}]
  %s3 = inlined_call_operand.vmem [shape: f32[2,3,2,128], index: 3, kind: output, shape index: {}]
  %s4 = sld [smem:[#allocation0]]
  $region37: #{relight_transform_color_transfer_lab.1} parent=0
    _
  %s6 = ssub.s32 1, %s4
  %s7 = scalar_select 0, %s6, %s4
  %s8 = sshll.u32 %s0, 4
  %s9 = int_to_ptr.vmem [resolvable:$true] %s8
  %11 = dma.vmem_to_smem %s9, 32, [#allocation3], [#allocation2]
  %s12 = sshll.u32 %s1, 4
  %s13 = int_to_ptr.vmem [resolvable:$true] %s12
  %15 = dma.vmem_to_smem %s13, 32, [#allocation4], [#allocation2]
  %16 = dma.done [#allocation2], 64
  %17 = sfence
  loop: start=0, step=1, limit=4
  $region2: #{relight_transform_color_transfer_lab.1} parent=0 // loop_pre_header
    _
  $region3: #{relight_transform_color_transfer_lab.1} parent=0 // loop_header
    %s19 = sphi 0, %s23
    %p20 = scmp.ge.s32.totalorder %s19, 4
    %s26 = sphi 0, %s38
    %s27 = sphi 0, %s34
    %s28 = sphi 0, %s26
    %s29 = sphi 0, %s27
    %s30 = sphi 0, %s28
    %s31 = sphi 0, %s29
    %s43 = sphi 0, %s45
    %s46 = sphi 0, %s43
    %s47 = sphi 0, %s46
    %s63 = sphi 0, %s47
    %s71 = sphi 0, %s73
    %s74 = sphi 0, %s71
    %s75 = sphi 0, %s74
    %s91 = sphi 0, %s75
  $region4: #{relight_transform_color_transfer_lab.1} parent=0 // loop_header_branch
    %22 = sbr.rel (%p20) target = $region8
  $region5: #{relight_transform_color_transfer_lab.1} parent=0 // loop_body
    %s24 = ssub.s32 %s19, 1
    %s25 = ssub.s32 %s19, 2
    %s32 = sadd.s32 1, %s27
    %p33 = scmp.ge.s32.totalorder %s32, 1
    %s34 = scalar_select %p33, 0, %s32
    %s35 = sadd.s32 1, %s26
    %s36 = scalar_select %p33, %s35, %s26
    %p37 = scmp.ge.s32.totalorder %s36, 2
    %s38 = scalar_select %p37, 0, %s36
    %s39 = ssub.s32 %s26, %s38
    %s40 = ssub.s32 %s27, %s34
    %s41 = sor.u32 %s39, %s40
    %p42 = scmp.eq.s32.totalorder %s41, 0
    %s44 = sadd.s32 %s43, 1
    %s45 = scalar_select %p42, %s43, %s44
    %p48 = pneg %p42
    %p49 = scmp.eq.s32.totalorder %s19, 1
    %p50 = por %p48, %p49
    %p51 = scmp.ne.s32.totalorder %s43, %s46
    %p52 = scmp.eq.s32.totalorder %s19, 0
    %p53 = por %p51, %p52
    %p54 = scmp.ne.s32.totalorder %s43, %s46
    %p55 = scmp.eq.s32.totalorder %s24, 1
    %p56 = por %p54, %p55
    %p57 = scmp.ne.s32.totalorder %s46, %s47
    %p58 = scmp.eq.s32.totalorder %s24, 0
    %p59 = por %p57, %p58
    %p60 = scmp.ne.s32.totalorder %s46, %s47
    %p61 = scmp.eq.s32.totalorder %s25, 1
    %p62 = por %p60, %p61
    %p64 = scmp.ne.s32.totalorder %s47, %s63
    %p65 = scmp.eq.s32.totalorder %s25, 0
    %p66 = por %p64, %p65
    %s67 = ssub.s32 %s26, %s38
    %s68 = ssub.s32 %s27, %s34
    %s69 = sor.u32 %s67, %s68
    %p70 = scmp.eq.s32.totalorder %s69, 0
    %s72 = sadd.s32 %s71, 1
    %s73 = scalar_select %p70, %s71, %s72
    %p76 = pneg %p70
    %p77 = scmp.eq.s32.totalorder %s19, 1
    %p78 = por %p76, %p77
    %p79 = scmp.ne.s32.totalorder %s71, %s74
    %p80 = scmp.eq.s32.totalorder %s19, 0
    %p81 = por %p79, %p80
    %p82 = scmp.ne.s32.totalorder %s71, %s74
    %p83 = scmp.eq.s32.totalorder %s24, 1
    %p84 = por %p82, %p83
    %p85 = scmp.ne.s32.totalorder %s74, %s75
    %p86 = scmp.eq.s32.totalorder %s24, 0
    %p87 = por %p85, %p86
    %p88 = scmp.ne.s32.totalorder %s74, %s75
    %p89 = scmp.eq.s32.totalorder %s25, 1
    %p90 = por %p88, %p89
    %p92 = scmp.ne.s32.totalorder %s75, %s91
    %p93 = scmp.eq.s32.totalorder %s25, 0
    %p94 = por %p92, %p93
    %p95 = scmp.le.s32.totalorder 1, %s19
    %p96 = scmp.lt.s32.totalorder %s19, 3
    %p97 = pnand %p95, %p96
    %p98 = pneg %p97
    // Predicated region
    $region9: #{relight_transform_color_transfer_lab.1} parent=5 // pred_check
      _
    $region10: #{relight_transform_color_transfer_lab.1} parent=5 // pred_check_branch
      %100 = sbr.rel (%p97) target = $region12
    $region11: #{relight_transform_color_transfer_lab.1} parent=5 // pred_region
      %s101 = ssub.s32 %s19, 1
    $region12: #{relight_transform_color_transfer_lab.1} parent=5 // pred_fallthru
      _
    %p102 = scmp.lt.s32.totalorder %s19, 2
    // Predicated region
    $region13: #{relight_transform_color_transfer_lab.1} parent=5 // pred_check
      %p103 = pneg %p102
    $region14: #{relight_transform_color_transfer_lab.1} parent=5 // pred_check_branch
      %105 = sbr.rel (%p103) target = $region16
    $region15: #{relight_transform_color_transfer_lab.1} parent=5 // pred_region
      // Predicated region
      $region17: #{relight_transform_color_transfer_lab.1} parent=15 // pred_check
        %p106 = pneg %p53
      $region18: #{relight_transform_color_transfer_lab.1} parent=15 // pred_check_branch
        %108 = sbr.rel (%p106) target = $region20
      $region19: #{relight_transform_color_transfer_lab.1} parent=15 // pred_region
        %p109 = scmp.lt.s32.totalorder %s26, 1
        %s110 = scalar_select %p109, %s26, 1
        %p111 = scmp.lt.s32.totalorder %s27, 0
        %s112 = scalar_select %p111, %s27, 0
        %s113 = smul.addr %s110, 3
        %s114 = sadd.s32 %s112, %s113
        %s115 = smul.addr %s114, 2
        %s116 = scalar_lea.vmem %s2, %s115
      $region20: #{relight_transform_color_transfer_lab.1} parent=15 // pred_fallthru
        _
    $region16: #{relight_transform_color_transfer_lab.1} parent=5 // pred_fallthru
      _
    %p117 = scmp.le.s32.totalorder 1, %s19
    %p118 = scmp.lt.s32.totalorder %s19, 3
    %p119 = pnand %p117, %p118
    %p120 = pneg %p119
    // Predicated region
    $region21: #{relight_transform_color_transfer_lab.1} parent=5 // pred_check
      _
    $region22: #{relight_transform_color_transfer_lab.1} parent=5 // pred_check_branch
      %122 = sbr.rel (%p119) target = $region24
    $region23: #{relight_transform_color_transfer_lab.1} parent=5 // pred_region
      %s123 = ssub.s32 %s19, 1
      %p124 = scmp.lt.s32.totalorder %s28, 1
      %s125 = scalar_select %p124, %s28, 1
      %p126 = scmp.lt.s32.totalorder %s29, 0
      %s127 = scalar_select %p126, %s29, 0
      %s128 = smul.addr %s125, 3
      %s129 = sadd.s32 %s127, %s128
      %s130 = smul.addr %s129, 2
      %s131 = scalar_lea.vmem %s2, %s130
      %p132 = pneg %p59
      %p133 = pneg %p56
      %p134 = pneg %p87
      %p135 = pneg %p84
      %p136 = scmp.lt.s32.totalorder %s28, 1
      %s137 = scalar_select %p136, %s28, 1
      %p138 = scmp.lt.s32.totalorder %s29, 0
      %s139 = scalar_select %p138, %s29, 0
      %s140 = smul.addr %s137, 3
      %s141 = sadd.s32 %s139, %s140
      %s142 = smul.addr %s141, 2
      %s143 = scalar_lea.vmem %s3, %s142
      %p144 = scmp.lt.s32.totalorder %s28, 1
      %s145 = scalar_select %p144, %s28, 1
      %p146 = scmp.lt.s32.totalorder %s29, 0
      %s147 = scalar_select %p146, %s29, 0
      %s148 = smul.addr %s145, 3
      %s149 = sadd.s32 %s147, %s148
      %s150 = smul.addr %s149, 2
      %s151 = scalar_lea.vmem %s2, %s150
      %p152 = scmp.lt.s32.totalorder %s28, 1
      %s153 = scalar_select %p152, %s28, 1
      %p154 = scmp.lt.s32.totalorder %s29, 0
      %s155 = scalar_select %p154, %s29, 0
      %s156 = smul.addr %s153, 3
      %s157 = sadd.s32 %s155, %s156
      %s158 = smul.addr %s157, 2
      %s159 = scalar_lea.vmem %s3, %s158
      %v160 = vld [vmem:[%s151] sm:$0x3]
      %v161 = vmax.f32 %v160, 1e-06
      %v162 = vmin.f32 %v161, 0.999999
      %s163 = scalar_lea.vmem %s151, 2
      %v164 = vld [vmem:[%s163] sm:$0x3]
      %v165 = vmax.f32 %v164, 1e-06
      %v166 = vmin.f32 %v165, 0.999999
      %s167 = scalar_lea.vmem %s151, 4
      %v168 = vld [vmem:[%s167] sm:$0x3]
      %v169 = vmax.f32 %v168, 1e-06
      %v170 = vmin.f32 %v169, 0.999999
      %v171 = vmul.f32 %v162, 0.3811
      %v172 = vmul.f32 %v166, 0.1967
      %v173 = vadd.f32 %v171, %v172
      %v174 = vmul.f32 %v170, 0.0241
      %v175 = vadd.f32 %v173, %v174
      %v176 = vmul.f32 %v162, 0.5783
      %v177 = vmul.f32 %v166, 0.7244
      %v178 = vadd.f32 %v176, %v177
      %v179 = vmul.f32 %v170, 0.1288
      %v180 = vadd.f32 %v178, %v179
      %v181 = vmul.f32 %v162, 0.0402
      %v182 = vmul.f32 %v166, 0.0782
      %v183 = vadd.f32 %v181, %v182
      %v184 = vmul.f32 %v170, 0.8444
      %v185 = vadd.f32 %v183, %v184
      %v186 = vlog2.pop %v175
      %v187 = vmul.f32 %v186, 0.6931472
      %v188 = vlog2.pop %v180
      %v189 = vmul.f32 %v188, 0.6931472
      %v190 = vlog2.pop %v185
      %v191 = vmul.f32 %v190, 0.6931472
      %s192 = smul.u32 %s28, 128
      %s193 = sld [smem:[#allocation3 + %s192]]
      %v194 = vstv %s193
      %v195 = vmul.f32 %v187, %v194
      %s196 = sadd.s32 %s192, 3
      %s197 = sld [smem:[#allocation3 + %s196]]
      %v198 = vstv %s197
      %v199 = vmul.f32 %v189, %v198
      %v200 = vadd.f32 %v195, %v199
      %s201 = sadd.s32 %s192, 6
      %s202 = sld [smem:[#allocation3 + %s201]]
      %v203 = vstv %s202
      %v204 = vmul.f32 %v191, %v203
      %v205 = vadd.f32 %v200, %v204
      %v206 = vmul.f32 %v205, 1.442695
      %v207 = vpow.pop %v206
      %s208 = sadd.s32 %s192, 1
      %s209 = sld [smem:[#allocation3 + %s208]]
      %v210 = vstv %s209
      %v211 = vmul.f32 %v187, %v210
      %s212 = sadd.s32 %s192, 4
      %s213 = sld [smem:[#allocation3 + %s212]]
      %v214 = vstv %s213
      %v215 = vmul.f32 %v189, %v214
      %v216 = vadd.f32 %v211, %v215
      %s217 = sadd.s32 %s192, 7
      %s218 = sld [smem:[#allocation3 + %s217]]
      %v219 = vstv %s218
      %v220 = vmul.f32 %v191, %v219
      %v221 = vadd.f32 %v216, %v220
      %v222 = vmul.f32 %v221, 1.442695
      %v223 = vpow.pop %v222
      %s224 = sadd.s32 %s192, 2
      %s225 = sld [smem:[#allocation3 + %s224]]
      %v226 = vstv %s225
      %v227 = vmul.f32 %v187, %v226
      %s228 = sadd.s32 %s192, 5
      %s229 = sld [smem:[#allocation3 + %s228]]
      %v230 = vstv %s229
      %v231 = vmul.f32 %v189, %v230
      %v232 = vadd.f32 %v227, %v231
      %s233 = sadd.s32 %s192, 8
      %s234 = sld [smem:[#allocation3 + %s233]]
      %v235 = vstv %s234
      %v236 = vmul.f32 %v191, %v235
      %v237 = vadd.f32 %v232, %v236
      %v238 = vmul.f32 %v237, 1.442695
      %v239 = vpow.pop %v238
      %s240 = sld [smem:[#allocation4 + %s192]]
      %v241 = vstv %s240
      %v242 = vmul.f32 %v207, %v241
      %s243 = sld [smem:[#allocation4 + %s196]]
      %v244 = vstv %s243
      %v245 = vmul.f32 %v223, %v244
      %v246 = vadd.f32 %v242, %v245
      %s247 = sld [smem:[#allocation4 + %s201]]
      %v248 = vstv %s247
      %v249 = vmul.f32 %v239, %v248
      %v250 = vadd.f32 %v246, %v249
      %v251 = vmax.f32 %v250, 0.0
      %v252 = vmin.f32 %v251, 1.0
      %253 = vst [vmem:[%s159] sm:$0x3] %v252
      %s254 = sld [smem:[#allocation4 + %s208]]
      %v255 = vstv %s254
      %v256 = vmul.f32 %v207, %v255
      %s257 = sld [smem:[#allocation4 + %s212]]
      %v258 = vstv %s257
      %v259 = vmul.f32 %v223, %v258
      %v260 = vadd.f32 %v256, %v259
      %s261 = sld [smem:[#allocation4 + %s217]]
      %v262 = vstv %s261
      %v263 = vmul.f32 %v239, %v262
      %v264 = vadd.f32 %v260, %v263
      %v265 = vmax.f32 %v264, 0.0
      %v266 = vmin.f32 %v265, 1.0
      %s267 = scalar_lea.vmem %s159, 2
      %268 = vst [vmem:[%s267] sm:$0x3] %v266
      %s269 = sld [smem:[#allocation4 + %s224]]
      %v270 = vstv %s269
      %v271 = vmul.f32 %v207, %v270
      %s272 = sld [smem:[#allocation4 + %s228]]
      %v273 = vstv %s272
      %v274 = vmul.f32 %v223, %v273
      %v275 = vadd.f32 %v271, %v274
      %s276 = sld [smem:[#allocation4 + %s233]]
      %v277 = vstv %s276
      %v278 = vmul.f32 %v239, %v277
      %v279 = vadd.f32 %v275, %v278
      %v280 = vmax.f32 %v279, 0.0
      %v281 = vmin.f32 %v280, 1.0
      %s282 = scalar_lea.vmem %s159, 4
      %283 = vst [vmem:[%s282] sm:$0x3] %v281
      %p284 = scmp.lt.s32.totalorder %s28, 1
      %s285 = scalar_select %p284, %s28, 1
      %p286 = scmp.lt.s32.totalorder %s29, 0
      %s287 = scalar_select %p286, %s29, 0
      %s288 = smul.addr %s285, 3
      %s289 = sadd.s32 %s287, %s288
      %s290 = smul.addr %s289, 2
      %s291 = scalar_lea.vmem %s3, %s290
      // Predicated region
      $region25: #{relight_transform_color_transfer_lab.1} parent=23 // pred_check
        %p292 = pneg %p84
      $region26: #{relight_transform_color_transfer_lab.1} parent=23 // pred_check_branch
        %294 = sbr.rel (%p292) target = $region28
      $region27: #{relight_transform_color_transfer_lab.1} parent=23 // pred_region
        _
      $region28: #{relight_transform_color_transfer_lab.1} parent=23 // pred_fallthru
        _
    $region24: #{relight_transform_color_transfer_lab.1} parent=5 // pred_fallthru
      _
    %p295 = scmp.le.s32.totalorder 2, %s19
    // Predicated region
    $region29: #{relight_transform_color_transfer_lab.1} parent=5 // pred_check
      %p296 = pneg %p295
    $region30: #{relight_transform_color_transfer_lab.1} parent=5 // pred_check_branch
      %298 = sbr.rel (%p296) target = $region32
    $region31: #{relight_transform_color_transfer_lab.1} parent=5 // pred_region
      %s299 = ssub.s32 %s19, 2
      // Predicated region
      $region33: #{relight_transform_color_transfer_lab.1} parent=31 // pred_check
        %p300 = pneg %p90
      $region34: #{relight_transform_color_transfer_lab.1} parent=31 // pred_check_branch
        %302 = sbr.rel (%p300) target = $region36
      $region35: #{relight_transform_color_transfer_lab.1} parent=31 // pred_region
        %p303 = scmp.lt.s32.totalorder %s30, 1
        %s304 = scalar_select %p303, %s30, 1
        %p305 = scmp.lt.s32.totalorder %s31, 0
        %s306 = scalar_select %p305, %s31, 0
        %s307 = smul.addr %s304, 3
        %s308 = sadd.s32 %s306, %s307
        %s309 = smul.addr %s308, 2
        %s310 = scalar_lea.vmem %s3, %s309
      $region36: #{relight_transform_color_transfer_lab.1} parent=31 // pred_fallthru
        _
    $region32: #{relight_transform_color_transfer_lab.1} parent=5 // pred_fallthru
      _
  $region6: #{relight_transform_color_transfer_lab.1} parent=0 // loop_footer
    %s23 = sadd.s32 1, %s19
  $region7: #{relight_transform_color_transfer_lab.1} parent=0 // loop_footer_branch
    %18 = sbr.rel target = $region3
  $region8: #{relight_transform_color_transfer_lab.1} parent=0 // loop_exit
    _

</llo_original>
